<compile_context>
chip_gen: v7x
topology: tpu7x:2x2x1
jax: 0.10.0
libtpu: 0.0.40
codegen_flags: <defaults>
</compile_context>

<pallas_src>
import functools

import jax
import jax.numpy as jnp
from jax.experimental import pallas as pl
from jax.experimental.pallas import tpu as pltpu

_BN_EPS = 1e-5
_SUBLANE = 8
_VMEM_LIMIT = 48 * 1024 * 1024  # <= v7x physical 64 MiB; harmless on v5e/v6e.


def _round_up(x, m):
    return ((x + m - 1) // m) * m


def _second_linear(h_act, w2t, b2):
    """Linear(F, 1) as broadcast-multiply + lane (XLU) reduction.

    Avoids an MXU matmul with N=1 and keeps the stored result narrow (4 B/row).
    h_act: (rows, F) f32, w2t: (1, F), b2: (1, 1) -> (rows, 1).
    """
    return jnp.sum(h_act * w2t, axis=-1, keepdims=True) + b2


# --------------------------------------------------------------------------- #
# Fused single-launch path (whole batch resident in VMEM).
# --------------------------------------------------------------------------- #
def _fused_kernel(x_ref, w1_ref, gamma_ref, beta_ref, w2t_ref, b2_ref, o_ref,
                  *, inv_n, compute_dtype):
    x = x_ref[...].astype(compute_dtype)
    w1 = w1_ref[...].astype(compute_dtype)
    # b1 deliberately omitted: constant per-feature bias cancels under
    # training-mode BatchNorm.
    h = jnp.dot(x, w1, preferred_element_type=jnp.float32)          # (B, F)

    mean = jnp.sum(h, axis=0, keepdims=True) * inv_n                # (1, F)
    var = jnp.sum(h * h, axis=0, keepdims=True) * inv_n - mean * mean
    var = jnp.maximum(var, 0.0)                                     # fp32 guard
    s = gamma_ref[...] * jax.lax.rsqrt(var + _BN_EPS)
    t = beta_ref[...] - mean * s

    h_act = jnp.maximum(h * s + t, 0.0)
    o_ref[...] = _second_linear(h_act, w2t_ref[...], b2_ref[...])


# --------------------------------------------------------------------------- #
# Two-phase path for large batches.
# --------------------------------------------------------------------------- #
def _stats_kernel(x_ref, w1_ref, xsum_ref, hsq_ref,
                  *, tile_b, batch, compute_dtype):
    """Phase 1: per-tile partial sums (colsum(x) and sum(h*h)).

    INVARIANT: rows >= batch (ragged last tile; x is NOT padded in HBM) are
    zeroed so they contribute exactly 0 to the statistics. This, together with
    dropping b1, is what makes inv_n = 1/batch correct in the wrapper.
    """
    row = (jax.lax.broadcasted_iota(jnp.int32, (tile_b, 1), 0)
           + pl.program_id(0) * tile_b)
    x = jnp.where(row < batch, x_ref[...], 0.0)                     # (tile_b, 2)

    h = jnp.dot(x.astype(compute_dtype), w1_ref[...].astype(compute_dtype),
                preferred_element_type=jnp.float32)                 # (tile_b, F)

    # sum(h) is recovered in the wrapper by linearity: (colsum x) @ W1.
    xsum_ref[...] = jnp.sum(x, axis=0, keepdims=True)               # (1, 2)

    # Cross-sublane reduction of h*h moved onto the MXU: ones(1, tile_b) @ hh.
    ones = jnp.ones((1, tile_b), jnp.float32)
    hsq_ref[...] = jnp.dot(ones, h * h,
                           preferred_element_type=jnp.float32)      # (1, F)


def _apply_kernel(x_ref, w1_ref, s_ref, t_ref, w2t_ref, b2_ref, o_ref,
                  *, compute_dtype):
    """Phase 2: recompute h = x @ W1, apply hoisted BN scale/offset, ReLU, W2."""
    x = x_ref[...].astype(compute_dtype)
    h = jnp.dot(x, w1_ref[...].astype(compute_dtype),
                preferred_element_type=jnp.float32)                 # (tile_b, F)
    h_act = jnp.maximum(h * s_ref[...] + t_ref[...], 0.0)
    o_ref[...] = _second_linear(h_act, w2t_ref[...], b2_ref[...])   # (tile_b, 1)


# --------------------------------------------------------------------------- #
# Wrapper.
# --------------------------------------------------------------------------- #
def discriminator_synthetic_forward(x, params, *, tile_b=4096,
                                    fused_max_rows=8192,
                                    compute_dtype=jnp.float32):
    """x: (B, 2) float32. params: see init_params. Returns (B, 1) float32."""
    B, in_dim = x.shape
    F = params["w1"].shape[1]
    out_dim = params["w2"].shape[1]
    assert out_dim == 1, "DiscriminatorSynthetic has a single output unit"

    w2t = params["w2"].reshape(1, F).astype(jnp.float32)  # (1, F) row vector
    b2 = params["b2"]                                      # (1, 1)

    def _full(shape):
        return pl.BlockSpec(shape, lambda *_: (0,) * len(shape))

    cparams = lambda sem: pltpu.CompilerParams(
        dimension_semantics=sem, vmem_limit_bytes=_VMEM_LIMIT)

    # ---- Fused single-launch path: whole batch fits comfortably in VMEM. ----
    if B <= fused_max_rows:
        return pl.pallas_call(
            functools.partial(_fused_kernel, inv_n=1.0 / B,
                              compute_dtype=compute_dtype),
            out_shape=jax.ShapeDtypeStruct((B, 1), jnp.float32),
            grid=(1,),
            in_specs=[_full((B, in_dim)), _full((in_dim, F)),
                      _full((1, F)), _full((1, F)),
                      _full((1, F)), _full((1, 1))],
            out_specs=_full((B, 1)),
            compiler_params=cparams(("arbitrary",)),
        )(x, params["w1"], params["gamma"], params["beta"], w2t, b2)

    # ---- Two-phase path: batch-tiled, global BN statistics. ----------------
    tile_b = _round_up(max(_SUBLANE, min(tile_b, 8192, B)), _SUBLANE)
    n_tiles = pl.cdiv(B, tile_b)

    # Phase 1: per-tile partial sums; batch axis "parallel" (v7x megacore OK).
    xsums, hsqs = pl.pallas_call(
        functools.partial(_stats_kernel, tile_b=tile_b, batch=B,
                          compute_dtype=compute_dtype),
        out_shape=(jax.ShapeDtypeStruct((n_tiles, 1, in_dim), jnp.float32),
                   jax.ShapeDtypeStruct((n_tiles, 1, F), jnp.float32)),
        grid=(n_tiles,),
        in_specs=[pl.BlockSpec((tile_b, in_dim), lambda i: (i, 0)),
                  pl.BlockSpec((in_dim, F), lambda i: (0, 0))],
        out_specs=(pl.BlockSpec((None, 1, in_dim), lambda i: (i, 0, 0)),
                   pl.BlockSpec((None, 1, F), lambda i: (i, 0, 0))),
        compiler_params=cparams(("parallel",)),
    )(x, params["w1"])

    # Tiny (1, F) epilogue in plain JAX: reduce partials, hoist BN scale/offset.
    sum_x = jnp.sum(xsums, axis=0)                       # (1, in_dim)
    sum_h = sum_x @ params["w1"]                         # (1, F), exact (no b1)
    sumsq = jnp.sum(hsqs, axis=0)                        # (1, F)
    mean = sum_h / B
    var = jnp.maximum(sumsq / B - mean * mean, 0.0)      # fp32 cancellation guard
    s = params["gamma"] * jax.lax.rsqrt(var + _BN_EPS)
    t = params["beta"] - mean * s

    # Phase 2: fused BN + ReLU + Linear(F,1); narrow (tile_b, 1) output blocks.
    out = pl.pallas_call(
        functools.partial(_apply_kernel, compute_dtype=compute_dtype),
        out_shape=jax.ShapeDtypeStruct((B, 1), jnp.float32),
        grid=(n_tiles,),
        in_specs=[pl.BlockSpec((tile_b, in_dim), lambda i: (i, 0)),
                  _full((in_dim, F)),
                  _full((1, F)), _full((1, F)),
                  _full((1, F)), _full((1, 1))],
        out_specs=pl.BlockSpec((tile_b, 1), lambda i: (i, 0)),
        compiler_params=cparams(("parallel",)),
    )(x, params["w1"], s, t, w2t, b2)
    return out


# --------------------------------------------------------------------------- #
# Params / reference.
# --------------------------------------------------------------------------- #
def init_params(key, in_dim=2, n_filters=128, out_dim=1):
    """PyTorch-style init: Linear U(-1/sqrt(in), 1/sqrt(in)); BN gamma=1, beta=0.
    Weights stored (in_features, out_features), i.e. transposed vs. PyTorch."""
    k1, k2, k3, k4 = jax.random.split(key, 4)
    bound1 = 1.0 / jnp.sqrt(jnp.float32(in_dim))
    bound2 = 1.0 / jnp.sqrt(jnp.float32(n_filters))
    w1 = jax.random.uniform(k1, (in_dim, n_filters), jnp.float32, -bound1, bound1)
    b1 = jax.random.uniform(k2, (1, n_filters), jnp.float32, -bound1, bound1)
    w2 = jax.random.uniform(k3, (n_filters, out_dim), jnp.float32, -bound2, bound2)
    b2 = jax.random.uniform(k4, (1, out_dim), jnp.float32, -bound2, bound2)
    gamma = jnp.ones((1, n_filters), jnp.float32)
    beta = jnp.zeros((1, n_filters), jnp.float32)
    # b1 is kept only for the reference: it cancels under training-mode BN and
    # is deliberately not consumed by the kernels.
    return {"w1": w1, "b1": b1, "gamma": gamma, "beta": beta, "w2": w2, "b2": b2}


def reference_forward(x, params):
    """Plain-JAX reference matching the PyTorch module (training-mode BN)."""
    h = x @ params["w1"] + params["b1"]
    mean = jnp.mean(h, axis=0, keepdims=True)
    var = jnp.mean((h - mean) ** 2, axis=0, keepdims=True)
    h = (h - mean) / jnp.sqrt(var + _BN_EPS)
    h = h * params["gamma"] + params["beta"]
    h = jnp.maximum(h, 0.0)
    return h @ params["w2"] + params["b2"]


if __name__ == "__main__":
    key = jax.random.PRNGKey(0)
    k_params, k1, k2, k3 = jax.random.split(key, 4)

    IN_DIM, N_FILTERS, OUT_DIM = 2, 128, 1
    params = init_params(k_params, in_dim=IN_DIM, n_filters=N_FILTERS,
                         out_dim=OUT_DIM)

    # 1) Small batch -> fused single-launch path.
    B = 8
    x = jax.random.normal(k1, (B, IN_DIM), jnp.float32)
    out = jax.block_until_ready(discriminator_synthetic_forward(x, params))
    ref = reference_forward(x, params)
    assert out.shape == (B, OUT_DIM), out.shape
    assert jnp.allclose(out, ref, atol=1e-4, rtol=1e-4), \
        float(jnp.max(jnp.abs(out - ref)))

    # 2) Fused path, batch not a multiple of 8.
    B2 = 13
    x2 = jax.random.normal(k2, (B2, IN_DIM), jnp.float32)
    out2 = jax.block_until_ready(discriminator_synthetic_forward(x2, params))
    ref2 = reference_forward(x2, params)
    assert out2.shape == (B2, OUT_DIM), out2.shape
    assert jnp.allclose(out2, ref2, atol=1e-4, rtol=1e-4), \
        float(jnp.max(jnp.abs(out2 - ref2)))

    # 3) Two-phase path (forced): multi-tile, ragged last tile exercises the
    #    in-kernel row masking and dropped out-of-bounds output rows.
    B3 = 37
    x3 = jax.random.normal(k3, (B3, IN_DIM), jnp.float32)
    out3 = jax.block_until_ready(
        discriminator_synthetic_forward(x3, params, tile_b=16, fused_max_rows=0))
    ref3 = reference_forward(x3, params)
    assert out3.shape == (B3, OUT_DIM), out3.shape
    assert jnp.allclose(out3, ref3, atol=1e-4, rtol=1e-4), \
        float(jnp.max(jnp.abs(out3 - ref3)))

    print("KERNEL_OK")
</pallas_src>

<mosaic_0001>
module attributes {stable_mosaic.version = 11 : i64} {
  func.func @_fused_kernel(%arg0: i32, %arg1: memref<8x2xf32, #tpu.memory_space<vmem>>, %arg2: memref<2x128xf32, #tpu.memory_space<vmem>>, %arg3: memref<1x128xf32, #tpu.memory_space<vmem>>, %arg4: memref<1x128xf32, #tpu.memory_space<vmem>>, %arg5: memref<1x128xf32, #tpu.memory_space<vmem>>, %arg6: memref<1x1xf32, #tpu.memory_space<vmem>>, %arg7: memref<8x1xf32, #tpu.memory_space<vmem>>) attributes {dimension_semantics = [#tpu.dimension_semantics<arbitrary>], iteration_bounds = array<i64: 1>, scalar_prefetch = 0 : i64, scratch_operands = 0 : i64, tpu.core_type = #tpu.core_type<tc>, window_params = [{pipeline_mode = #tpu.pipeline_mode<synchronous>, transform_indices = @transform_0, window_bounds = array<i64: 8, 2>}, {pipeline_mode = #tpu.pipeline_mode<synchronous>, transform_indices = @transform_1, window_bounds = array<i64: 2, 128>}, {pipeline_mode = #tpu.pipeline_mode<synchronous>, transform_indices = @transform_2, window_bounds = array<i64: 1, 128>}, {pipeline_mode = #tpu.pipeline_mode<synchronous>, transform_indices = @transform_3, window_bounds = array<i64: 1, 128>}, {pipeline_mode = #tpu.pipeline_mode<synchronous>, transform_indices = @transform_4, window_bounds = array<i64: 1, 128>}, {pipeline_mode = #tpu.pipeline_mode<synchronous>, transform_indices = @transform_5, window_bounds = array<i64: 1, 1>}, {pipeline_mode = #tpu.pipeline_mode<synchronous>, transform_indices = @transform_6, window_bounds = array<i64: 8, 1>}]} {
    %c0 = arith.constant 0 : index
    %c0_0 = arith.constant 0 : index
    %0 = vector.load %arg1[%c0, %c0_0] : memref<8x2xf32, #tpu.memory_space<vmem>>, vector<8x2xf32>
    %c0_1 = arith.constant 0 : index
    %c0_2 = arith.constant 0 : index
    %1 = vector.load %arg2[%c0_1, %c0_2] : memref<2x128xf32, #tpu.memory_space<vmem>>, vector<2x128xf32>
    %cst = arith.constant dense<0.000000e+00> : vector<8x128xf32>
    %2 = tpu.matmul %0, %1, %cst {dimension_numbers = #tpu.dot_dimension_numbers<[1], [0], [0], [1], [0, 0, 1, 1], [], []>} : vector<8x2xf32>, vector<2x128xf32>, vector<8x128xf32> -> vector<8x128xf32>
    %cst_3 = arith.constant dense<0.000000e+00> : vector<128xf32>
    %3 = vector.multi_reduction <add>, %2, %cst_3 [0] : vector<8x128xf32> to vector<128xf32>
    %4 = vector.shape_cast %3 : vector<128xf32> to vector<1x128xf32>
    %cst_4 = arith.constant 1.250000e-01 : f32
    %5 = vector.broadcast %cst_4 : f32 to vector<1x128xf32>
    %6 = arith.mulf %4, %5 : vector<1x128xf32>
    %7 = arith.mulf %2, %2 : vector<8x128xf32>
    %cst_5 = arith.constant dense<0.000000e+00> : vector<128xf32>
    %8 = vector.multi_reduction <add>, %7, %cst_5 [0] : vector<8x128xf32> to vector<128xf32>
    %9 = vector.shape_cast %8 : vector<128xf32> to vector<1x128xf32>
    %cst_6 = arith.constant 1.250000e-01 : f32
    %10 = vector.broadcast %cst_6 : f32 to vector<1x128xf32>
    %11 = arith.mulf %9, %10 : vector<1x128xf32>
    %12 = arith.mulf %6, %6 : vector<1x128xf32>
    %13 = arith.subf %11, %12 : vector<1x128xf32>
    %cst_7 = arith.constant 0.000000e+00 : f32
    %14 = vector.broadcast %cst_7 : f32 to vector<1x128xf32>
    %15 = arith.maximumf %13, %14 : vector<1x128xf32>
    %c0_8 = arith.constant 0 : index
    %c0_9 = arith.constant 0 : index
    %16 = vector.load %arg3[%c0_8, %c0_9] : memref<1x128xf32, #tpu.memory_space<vmem>>, vector<1x128xf32>
    %cst_10 = arith.constant 9.99999974E-6 : f32
    %17 = vector.broadcast %cst_10 : f32 to vector<1x128xf32>
    %18 = arith.addf %15, %17 : vector<1x128xf32>
    %19 = math.rsqrt %18 : vector<1x128xf32>
    %20 = arith.mulf %16, %19 : vector<1x128xf32>
    %c0_11 = arith.constant 0 : index
    %c0_12 = arith.constant 0 : index
    %21 = vector.load %arg4[%c0_11, %c0_12] : memref<1x128xf32, #tpu.memory_space<vmem>>, vector<1x128xf32>
    %22 = arith.mulf %6, %20 : vector<1x128xf32>
    %23 = arith.subf %21, %22 : vector<1x128xf32>
    %24 = vector.broadcast %20 : vector<1x128xf32> to vector<8x128xf32>
    %25 = arith.mulf %2, %24 : vector<8x128xf32>
    %26 = vector.broadcast %23 : vector<1x128xf32> to vector<8x128xf32>
    %27 = arith.addf %25, %26 : vector<8x128xf32>
    %cst_13 = arith.constant 0.000000e+00 : f32
    %28 = vector.broadcast %cst_13 : f32 to vector<8x128xf32>
    %29 = arith.maximumf %27, %28 : vector<8x128xf32>
    %c0_14 = arith.constant 0 : index
    %c0_15 = arith.constant 0 : index
    %30 = vector.load %arg5[%c0_14, %c0_15] : memref<1x128xf32, #tpu.memory_space<vmem>>, vector<1x128xf32>
    %c0_16 = arith.constant 0 : index
    %c0_17 = arith.constant 0 : index
    %31 = vector.load %arg6[%c0_16, %c0_17] : memref<1x1xf32, #tpu.memory_space<vmem>>, vector<1x1xf32>
    %32 = vector.broadcast %30 : vector<1x128xf32> to vector<8x128xf32>
    %33 = arith.mulf %29, %32 : vector<8x128xf32>
    %cst_18 = arith.constant dense<0.000000e+00> : vector<8xf32>
    %34 = vector.multi_reduction <add>, %33, %cst_18 [1] : vector<8x128xf32> to vector<8xf32>
    %35 = vector.shape_cast %34 : vector<8xf32> to vector<8x1xf32>
    %36 = vector.broadcast %31 : vector<1x1xf32> to vector<8x1xf32>
    %37 = arith.addf %35, %36 : vector<8x1xf32>
    %c0_19 = arith.constant 0 : index
    %c0_20 = arith.constant 0 : index
    %38 = vector.load %arg7[%c0_19, %c0_20] : memref<8x1xf32, #tpu.memory_space<vmem>>, vector<8x1xf32>
    tpu.vector_store %arg7[%c0_19, %c0_20], %37 {strides = array<i32>} : memref<8x1xf32, #tpu.memory_space<vmem>>, vector<8x1xf32>,
    return
  }
  func.func @transform_0(%arg0: i32) -> (i32, i32) {
    %c0_i32 = arith.constant 0 : i32
    %c0_i32_0 = arith.constant 0 : i32
    %c0_i32_1 = arith.constant 0 : i32
    return %c0_i32, %c0_i32_0 : i32, i32
  }
  func.func @transform_1(%arg0: i32) -> (i32, i32) {
    %c0_i32 = arith.constant 0 : i32
    %c0_i32_0 = arith.constant 0 : i32
    %c0_i32_1 = arith.constant 0 : i32
    return %c0_i32, %c0_i32_0 : i32, i32
  }
  func.func @transform_2(%arg0: i32) -> (i32, i32) {
    %c0_i32 = arith.constant 0 : i32
    %c0_i32_0 = arith.constant 0 : i32
    %c0_i32_1 = arith.constant 0 : i32
    return %c0_i32, %c0_i32_0 : i32, i32
  }
  func.func @transform_3(%arg0: i32) -> (i32, i32) {
    %c0_i32 = arith.constant 0 : i32
    %c0_i32_0 = arith.constant 0 : i32
    %c0_i32_1 = arith.constant 0 : i32
    return %c0_i32, %c0_i32_0 : i32, i32
  }
  func.func @transform_4(%arg0: i32) -> (i32, i32) {
    %c0_i32 = arith.constant 0 : i32
    %c0_i32_0 = arith.constant 0 : i32
    %c0_i32_1 = arith.constant 0 : i32
    return %c0_i32, %c0_i32_0 : i32, i32
  }
  func.func @transform_5(%arg0: i32) -> (i32, i32) {
    %c0_i32 = arith.constant 0 : i32
    %c0_i32_0 = arith.constant 0 : i32
    %c0_i32_1 = arith.constant 0 : i32
    return %c0_i32, %c0_i32_0 : i32, i32
  }
  func.func @transform_6(%arg0: i32) -> (i32, i32) {
    %c0_i32 = arith.constant 0 : i32
    %c0_i32_0 = arith.constant 0 : i32
    %c0_i32_1 = arith.constant 0 : i32
    return %c0_i32, %c0_i32_0 : i32, i32
  }
}

</mosaic_0001>

<llo_original>
// kernel: tpu_custom_call.1
$region0: #{tpu_custom_call.1}
  #allocation0 [shape = 'u32[]', space=smem, size = 0x4, offset = 0x4, fixed_abs, tag = 'smem constant byte address 0x4 - core index']
  #allocation1 [shape = 'u32[144,128]{1,0:T(1,128)}', space=vmem, size = 0x12000, scoped, tag = 'internal scratch']
  #allocation2 [shape = 'f32[1,1]{1,0:T(1,128)S(1)}', space=vmem, size = 0x200, scoped, tag = 'scoped memory for tpu_custom_call.1']
  %s0 = inlined_call_operand.vmem [shape: f32[8,2], index: 0, kind: input, shape index: {}]
  %s1 = inlined_call_operand.vmem [shape: f32[2,128], index: 1, kind: input, shape index: {}]
  %s2 = inlined_call_operand.vmem [shape: f32[1,128], index: 2, kind: input, shape index: {}]
  %s3 = inlined_call_operand.vmem [shape: f32[1,128], index: 3, kind: input, shape index: {}]
  %s4 = inlined_call_operand.vmem [shape: f32[1,128], index: 4, kind: input, shape index: {}]
  %s5 = inlined_call_operand.<no memory space> [shape: f32[1,1], index: 5, kind: input, shape index: {}]
  %s6 = inlined_call_operand.vmem [shape: f32[8,1], index: 6, kind: output, shape index: {}]
  %s7 = sld [smem:[#allocation0]]
  $region34: #{tpu_custom_call.1} parent=0
    _
  %s9 = ssub.s32 1, %s7
  %s10 = scalar_select 0, %s9, %s7
  %v11 = vstv %s5
  %12 = vst [vmem:[#allocation2] sm:$0x1] %v11
  // Predicated region
  $region2: #{tpu_custom_call.1} parent=0 // pred_check
    _
  $region3: #{tpu_custom_call.1} parent=0 // pred_check_branch
    %14 = sbr.rel (0) target = $region5
  $region4: #{tpu_custom_call.1} parent=0 // pred_region
    _
  $region5: #{tpu_custom_call.1} parent=0 // pred_fallthru
    _
  // Predicated region
  $region6: #{tpu_custom_call.1} parent=0 // pred_check
    _
  $region7: #{tpu_custom_call.1} parent=0 // pred_check_branch
    %16 = sbr.rel (0) target = $region9
  $region8: #{tpu_custom_call.1} parent=0 // pred_region
    _
  $region9: #{tpu_custom_call.1} parent=0 // pred_fallthru
    _
  // Predicated region
  $region10: #{tpu_custom_call.1} parent=0 // pred_check
    _
  $region11: #{tpu_custom_call.1} parent=0 // pred_check_branch
    %18 = sbr.rel (0) target = $region13
  $region12: #{tpu_custom_call.1} parent=0 // pred_region
    _
  $region13: #{tpu_custom_call.1} parent=0 // pred_fallthru
    _
  // Predicated region
  $region14: #{tpu_custom_call.1} parent=0 // pred_check
    _
  $region15: #{tpu_custom_call.1} parent=0 // pred_check_branch
    %20 = sbr.rel (0) target = $region17
  $region16: #{tpu_custom_call.1} parent=0 // pred_region
    _
  $region17: #{tpu_custom_call.1} parent=0 // pred_fallthru
    _
  // Predicated region
  $region18: #{tpu_custom_call.1} parent=0 // pred_check
    _
  $region19: #{tpu_custom_call.1} parent=0 // pred_check_branch
    %22 = sbr.rel (0) target = $region21
  $region20: #{tpu_custom_call.1} parent=0 // pred_region
    _
  $region21: #{tpu_custom_call.1} parent=0 // pred_fallthru
    _
  // Predicated region
  $region22: #{tpu_custom_call.1} parent=0 // pred_check
    _
  $region23: #{tpu_custom_call.1} parent=0 // pred_check_branch
    %24 = sbr.rel (0) target = $region25
  $region24: #{tpu_custom_call.1} parent=0 // pred_region
    _
  $region25: #{tpu_custom_call.1} parent=0 // pred_fallthru
    _
  %v25 = vld [vmem:[%s0] sm:$0xff]
  %v26 = vld [vmem:[%s1] sm:$0x3]
  %vm27 = vcmask 15360
  %v29 = vsel %vm27, %v25, 0
  %vm31 = vcmask 1041408
  %v33 = vsel %vm31, %v26, 0
  %35 = vmatprep.subr.mxu0 0.0
  %36 = vmatpush1.msra.mxu0 %v33
  %37 = vmatprep.subr.mxu0 0.0
  %38 = vmatpush1.msra.mxu0 0.0
  %39 = vmatprep.subr.mxu0 0.0
  %40 = vmatpush1.msra.mxu0 0.0
  %41 = vmatprep.subr.mxu0 0.0
  %42 = vmatpush1.msra.mxu0 0.0
  %43 = vmatprep.subr.mxu0 0.0
  %44 = vmatpush1.msra.mxu0 0.0
  %45 = vmatprep.subr.mxu0 0.0
  %46 = vmatpush1.msra.mxu0 0.0
  %47 = vmatprep.subr.mxu0 0.0
  %48 = vmatpush1.msra.mxu0 0.0
  %49 = vmatprep.subr.mxu0 0.0
  %50 = vmatpush1.msra.mxu0 0.0
  %51 = vmatprep.subr.mxu0 0.0
  %52 = vmatpush1.msra.mxu0 0.0
  %53 = vmatprep.subr.mxu0 0.0
  %54 = vmatpush1.msra.mxu0 0.0
  %55 = vmatprep.subr.mxu0 0.0
  %56 = vmatpush1.msra.mxu0 0.0
  %57 = vmatprep.subr.mxu0 0.0
  %58 = vmatpush1.msra.mxu0 0.0
  %59 = vmatprep.subr.mxu0 0.0
  %60 = vmatpush1.msra.mxu0 0.0
  %61 = vmatprep.subr.mxu0 0.0
  %62 = vmatpush1.msra.mxu0 0.0
  %63 = vmatprep.subr.mxu0 0.0
  %64 = vmatpush1.msra.mxu0 0.0
  %65 = vmatprep.subr.mxu0 0.0
  %66 = vmatpush1.msra.mxu0 0.0
  %67 = vmatprep.subr.mxu0 0.0
  %68 = vmatpush1.msra.mxu0 0.0
  %69 = vmatprep.subr.mxu0 0.0
  %70 = vmatpush1.msra.mxu0 0.0
  %71 = vmatprep.subr.mxu0 0.0
  %72 = vmatpush1.msra.mxu0 0.0
  %73 = vmatprep.subr.mxu0 0.0
  %74 = vmatpush1.msra.mxu0 0.0
  %75 = vmatprep.subr.mxu0 0.0
  %76 = vmatpush1.msra.mxu0 0.0
  %77 = vmatprep.subr.mxu0 0.0
  %78 = vmatpush1.msra.mxu0 0.0
  %79 = vmatprep.subr.mxu0 0.0
  %80 = vmatpush1.msra.mxu0 0.0
  %81 = vmatprep.subr.mxu0 0.0
  %82 = vmatpush1.msra.mxu0 0.0
  %83 = vmatprep.subr.mxu0 0.0
  %84 = vmatpush1.msra.mxu0 0.0
  %85 = vmatprep.subr.mxu0 0.0
  %86 = vmatpush1.msra.mxu0 0.0
  %87 = vmatprep.subr.mxu0 0.0
  %88 = vmatpush1.msra.mxu0 0.0
  %89 = vmatprep.subr.mxu0 0.0
  %90 = vmatpush1.msra.mxu0 0.0
  %91 = vmatprep.subr.mxu0 0.0
  %92 = vmatpush1.msra.mxu0 0.0
  %93 = vmatprep.subr.mxu0 0.0
  %94 = vmatpush1.msra.mxu0 0.0
  %95 = vmatprep.subr.mxu0 0.0
  %96 = vmatpush1.msra.mxu0 0.0
  %97 = vmatprep.subr.mxu0 0.0
  %98 = vmatpush1.msra.mxu0 0.0
  %99 = vmatprep.mubr.f32.mxu0 0.0
  %100 = vmatmul.mubr.f32.gmra.mrb[0].mxu0 %v29
  %v101 = vpop.f32.mrb[0].mxu0
  %v102 = vadd.f32 0.0, %v101
  %v103 = vpop.f32.mrb[0].mxu0
  %104 = vdwg.mxu0
  %v105 = vrot.slane %v102, 4
  %v106 = vadd.f32 %v102, %v105
  %v107 = vrot.slane %v106, 2
  %v108 = vadd.f32 %v106, %v107
  %v109 = vrot.slane %v108, 1
  %v110 = vadd.f32 %v108, %v109
  %v111 = vmul.f32 %v110, 0.125
  %v112 = vmul.f32 %v102, %v102
  %v113 = vrot.slane %v112, 4
  %v114 = vadd.f32 %v112, %v113
  %v115 = vrot.slane %v114, 2
  %v116 = vadd.f32 %v114, %v115
  %v117 = vrot.slane %v116, 1
  %v118 = vadd.f32 %v116, %v117
  %v119 = vmul.f32 %v118, 0.125
  %v120 = vmul.f32 %v111, %v111
  %v121 = vsub.f32 %v119, %v120
  %v122 = vmax.f32 %v121, 0.0
  %v123 = vld [vmem:[%s2] sm:$0x1]
  %v124 = vadd.f32 %v122, 1e-05
  %v125 = vrsqrt.pop %v124
  %v126 = vmul.f32 %v123, %v125
  %v127 = vld [vmem:[%s3] sm:$0x1]
  %v128 = vmul.f32 %v111, %v126
  %v129 = vsub.f32 %v127, %v128
  %v131 = vlaneseq
  %v132 = vshrl.u32 %v131, 7
  %v133 = vsub.s32 0, %v132
  %v134 = vrot.slane %v126, %v133
  %v136 = vmul.f32 %v102, %v134
  %v138 = vlaneseq
  %v139 = vshrl.u32 %v138, 7
  %v140 = vsub.s32 0, %v139
  %v141 = vrot.slane %v129, %v140
  %v143 = vadd.f32 %v136, %v141
  %v144 = vmax.f32 %v143, 0.0
  %v145 = vld [vmem:[%s4] sm:$0x1]
  %v146 = vld [vmem:[#allocation2] sm:$0x1]
  %v148 = vlaneseq
  %v149 = vshrl.u32 %v148, 7
  %v150 = vsub.s32 0, %v149
  %v151 = vrot.slane %v145, %v150
  %v153 = vmul.f32 %v144, %v151
  %154 = vadd.xlane.f32.xlu0 %v153
  %v155 = vpop.xlane.xlu0 %154
  %v157 = vlaneseq
  %v158 = vshrl.u32 %v157, 7
  %v159 = vsub.s32 0, %v158
  %v160 = vrot.slane %v146, %v159
  %v162 = vadd.f32 %v155, %v160
  %vm163 = vcmask 7168
  %164 = vst.msk [vmem:[%s6] sm:$0xff] %vm163, %v162
  // Predicated region
  $region26: #{tpu_custom_call.1} parent=0 // pred_check
    _
  $region27: #{tpu_custom_call.1} parent=0 // pred_check_branch
    %166 = sbr.rel (0) target = $region29
  $region28: #{tpu_custom_call.1} parent=0 // pred_region
    _
  $region29: #{tpu_custom_call.1} parent=0 // pred_fallthru
    _
  // Predicated region
  $region30: #{tpu_custom_call.1} parent=0 // pred_check
    _
  $region31: #{tpu_custom_call.1} parent=0 // pred_check_branch
    %168 = sbr.rel (0) target = $region33
  $region32: #{tpu_custom_call.1} parent=0 // pred_region
    _
  $region33: #{tpu_custom_call.1} parent=0 // pred_fallthru
    _

</llo_original>
